<compile_context>
chip_gen: v7x
topology: tpu7x:2x2x1
jax: 0.10.0
libtpu: 0.0.40
codegen_flags: <defaults>
</compile_context>

<pallas_src>
import math
from functools import partial

import jax
import jax.numpy as jnp
from jax.experimental import pallas as pl
from jax.experimental.pallas import tpu as pltpu

LANE = 128
SUBLANE = 8


def _round_up(n, m):
    return ((n + m - 1) // m) * m


def _cdiv(a, b):
    return -(-a // b)


def _mlp_kernel(x_ref, w1_ref, w2_ref, w3_ref, w4_ref, b_ref, o_ref, *,
                hid_p, d_out):
    # MXU: bf16 operands, f32 accumulation.  VPU elementwise stays f32.
    x = x_ref[...].astype(jnp.bfloat16)
    h = jnp.dot(x, w1_ref[...], preferred_element_type=jnp.float32)
    h = jnp.maximum(h + b_ref[0:1, :hid_p], 0.0)
    h = jnp.dot(h.astype(jnp.bfloat16), w2_ref[...],
                preferred_element_type=jnp.float32)
    h = jnp.maximum(h + b_ref[1:2, :hid_p], 0.0)
    h = jnp.dot(h.astype(jnp.bfloat16), w3_ref[...],
                preferred_element_type=jnp.float32)
    h = jnp.maximum(h + b_ref[2:3, :hid_p], 0.0)
    h = jnp.dot(h.astype(jnp.bfloat16), w4_ref[...],
                preferred_element_type=jnp.float32)
    o_ref[...] = (h + b_ref[3:4, :d_out]).astype(o_ref.dtype)


def prepare_params(params):
    """One-time pad / bf16-cast / bias-pack of the weights (do NOT redo per call)."""
    (w1, b1), (w2, b2), (w3, b3), (w4, b4) = params
    d_in, hidden = w1.shape
    d_out = w4.shape[1]
    hid_p = _round_up(hidden, LANE)      # lane-dense hidden (exact: zero pad)
    b_width = max(hid_p, d_out)

    def pad2(a, r, c):
        return jnp.pad(a, ((0, r - a.shape[0]), (0, c - a.shape[1])))

    w1_p = pad2(w1, d_in, hid_p).astype(jnp.bfloat16)    # d_in left unpadded
    w2_p = pad2(w2, hid_p, hid_p).astype(jnp.bfloat16)
    w3_p = pad2(w3, hid_p, hid_p).astype(jnp.bfloat16)
    w4_p = pad2(w4, hid_p, d_out).astype(jnp.bfloat16)   # d_out left unpadded
    biases = jnp.concatenate(
        [pad2(b1, 1, b_width), pad2(b2, 1, b_width),
         pad2(b3, 1, b_width), pad2(b4, 1, b_width)], axis=0)  # (4, b_width) f32

    dims = (d_in, hidden, d_out, hid_p)
    return (w1_p, w2_p, w3_p, w4_p, biases, dims)


def mlp_forward(x, prepared, *, batch_tile=512):
    """x: [B, d_in] f32.  prepared: output of prepare_params()."""
    w1_p, w2_p, w3_p, w4_p, biases, dims = prepared
    d_in, hidden, d_out, hid_p = dims
    B = x.shape[0]

    # --- batch tiling: even tiles, >=2 tiles for v7x megacore when possible ---
    batch_tile = max(SUBLANE, min(int(batch_tile), 2048))   # v7x VMEM guardrail
    B8 = _round_up(max(B, 1), SUBLANE)
    n_tiles = _cdiv(B8, batch_tile)
    if n_tiles == 1 and B8 >= 2 * SUBLANE:
        n_tiles = 2                      # feed both TensorCores on v7x
    tb = _round_up(_cdiv(B8, n_tiles), SUBLANE)
    b_p = n_tiles * tb

    # Only batch-dim padding (cheap, often a no-op); no feature pad, no cast.
    x_p = x if b_p == B else jnp.pad(x, ((0, b_p - B), (0, 0)))

    # Unpadded work estimate (advisory for XLA scheduling).
    flops = 2 * B * (d_in * hidden + 2 * hidden * hidden + hidden * d_out)
    bytes_accessed = (B * d_in * 4
                      + (d_in * hidden + 2 * hidden * hidden + hidden * d_out) * 2
                      + (3 * hidden + d_out) * 4
                      + B * d_out * 4)

    const = lambda i: (0, 0)   # weights/biases VMEM-resident across batch tiles
    kernel = partial(_mlp_kernel, hid_p=hid_p, d_out=d_out)

    out_p = pl.pallas_call(
        kernel,
        out_shape=jax.ShapeDtypeStruct((b_p, d_out), jnp.float32),
        grid_spec=pltpu.PrefetchScalarGridSpec(
            num_scalar_prefetch=0,
            grid=(n_tiles,),
            in_specs=[
                pl.BlockSpec((tb, d_in), lambda i: (i, 0)),   # x, batch-tiled
                pl.BlockSpec(w1_p.shape, const),              # w1
                pl.BlockSpec(w2_p.shape, const),              # w2
                pl.BlockSpec(w3_p.shape, const),              # w3
                pl.BlockSpec(w4_p.shape, const),              # w4
                pl.BlockSpec(biases.shape, const),            # packed biases
            ],
            out_specs=pl.BlockSpec((tb, d_out), lambda i: (i, 0)),
        ),
        compiler_params=pltpu.CompilerParams(
            dimension_semantics=("parallel",),   # megacore split on v7x
            vmem_limit_bytes=32 * 1024 * 1024,
        ),
        cost_estimate=pl.CostEstimate(
            flops=flops, transcendentals=0, bytes_accessed=bytes_accessed),
    )(x_p, w1_p, w2_p, w3_p, w4_p, biases)

    return out_p if b_p == B else out_p[:B]


# ------------------------- init + references -------------------------------

def orthogonal(key, rows, cols):
    # Deterministic stand-in for torch.nn.init.orthogonal_ on an (out, in)
    # weight; returned already transposed to [in, out] layout.
    a = jax.random.normal(key, (max(rows, cols), min(rows, cols)), jnp.float32)
    q, r = jnp.linalg.qr(a)
    q = q * jnp.sign(jnp.diag(r))[None, :]
    w_out_in = q[:rows, :cols] if rows >= cols else q[:cols, :rows].T
    return w_out_in.T  # [in, out]


def make_linear(key, in_dim, out_dim):
    kw, kb = jax.random.split(key)
    w = orthogonal(kw, out_dim, in_dim)                       # [in, out]
    bound = 1.0 / math.sqrt(in_dim)
    b = jax.random.uniform(kb, (1, out_dim), jnp.float32, -bound, bound)
    return w, b


def reference_forward(x, params):
    (w1, b1), (w2, b2), (w3, b3), (w4, b4) = params
    h = jax.nn.relu(x @ w1 + b1)
    h = jax.nn.relu(h @ w2 + b2)
    h = jax.nn.relu(h @ w3 + b3)
    return h @ w4 + b4


def reference_forward_bf16(x, params):
    # Mirrors the kernel's precision: bf16 operands, f32 accum, f32 elementwise.
    def mm(a, w):
        return jnp.dot(a.astype(jnp.bfloat16), w.astype(jnp.bfloat16),
                       preferred_element_type=jnp.float32)
    (w1, b1), (w2, b2), (w3, b3), (w4, b4) = params
    h = jax.nn.relu(mm(x, w1) + b1)
    h = jax.nn.relu(mm(h, w2) + b2)
    h = jax.nn.relu(mm(h, w3) + b3)
    return mm(h, w4) + b4


if __name__ == "__main__":
    batch, input_dim, hidden_dim, output_dim = 8, 16, 32, 8

    root = jax.random.PRNGKey(0)
    kx, k1, k2, k3, k4 = jax.random.split(root, 5)

    x = jax.random.normal(kx, (batch, input_dim), jnp.float32)
    params = (
        make_linear(k1, input_dim, hidden_dim),
        make_linear(k2, hidden_dim, hidden_dim),
        make_linear(k3, hidden_dim, hidden_dim),
        make_linear(k4, hidden_dim, output_dim),
    )
    prepared = prepare_params(params)   # pad / cast / pack ONCE

    out = jax.block_until_ready(mlp_forward(x, prepared))
    assert out.shape == (batch, output_dim)
    # Tight check vs precision-matched (bf16-operand) reference, loose check vs
    # pure-f32 PyTorch-semantics reference.
    assert jnp.allclose(out, reference_forward_bf16(x, params),
                        atol=1e-2, rtol=1e-2)
    assert jnp.allclose(out, reference_forward(x, params),
                        atol=1e-1, rtol=1e-1)

    # Multi-tile batch grid (resident weights, pipelined x/out DMAs, "parallel"
    # batch axis for v7x's second TensorCore).
    xb = jax.random.normal(jax.random.PRNGKey(1), (256, input_dim), jnp.float32)
    outb = jax.block_until_ready(mlp_forward(xb, prepared, batch_tile=128))
    assert outb.shape == (256, output_dim)
    assert jnp.allclose(outb, reference_forward_bf16(xb, params),
                        atol=1e-2, rtol=1e-2)

    # Awkward batch: exercises even-tile selection, forced 2-tile split and the
    # batch-only padding path (B=20 -> 2 tiles of 16 rows, sliced back to 20).
    xo = jax.random.normal(jax.random.PRNGKey(2), (20, input_dim), jnp.float32)
    outo = jax.block_until_ready(mlp_forward(xo, prepared))
    assert outo.shape == (20, output_dim)
    assert jnp.allclose(outo, reference_forward_bf16(xo, params),
                        atol=1e-2, rtol=1e-2)

    print("KERNEL_OK")
</pallas_src>

<mosaic_0001>
module attributes {stable_mosaic.version = 11 : i64} {
  func.func @_mlp_kernel(%arg0: i32, %arg1: memref<8x16xf32, #tpu.memory_space<vmem>>, %arg2: memref<16x128xbf16, #tpu.memory_space<vmem>>, %arg3: memref<128x128xbf16, #tpu.memory_space<vmem>>, %arg4: memref<128x128xbf16, #tpu.memory_space<vmem>>, %arg5: memref<128x8xbf16, #tpu.memory_space<vmem>>, %arg6: memref<4x128xf32, #tpu.memory_space<vmem>>, %arg7: memref<8x8xf32, #tpu.memory_space<vmem>>) attributes {dimension_semantics = [#tpu.dimension_semantics<parallel>], iteration_bounds = array<i64: 1>, scalar_prefetch = 0 : i64, scratch_operands = 0 : i64, tpu.core_type = #tpu.core_type<tc>, window_params = [{transform_indices = @transform_0, window_bounds = array<i64: 8, 16>}, {pipeline_mode = #tpu.pipeline_mode<synchronous>, transform_indices = @transform_1, window_bounds = array<i64: 16, 128>}, {pipeline_mode = #tpu.pipeline_mode<synchronous>, transform_indices = @transform_2, window_bounds = array<i64: 128, 128>}, {pipeline_mode = #tpu.pipeline_mode<synchronous>, transform_indices = @transform_3, window_bounds = array<i64: 128, 128>}, {pipeline_mode = #tpu.pipeline_mode<synchronous>, transform_indices = @transform_4, window_bounds = array<i64: 128, 8>}, {pipeline_mode = #tpu.pipeline_mode<synchronous>, transform_indices = @transform_5, window_bounds = array<i64: 4, 128>}, {transform_indices = @transform_6, window_bounds = array<i64: 8, 8>}]} {
    %c0 = arith.constant 0 : index
    %c0_0 = arith.constant 0 : index
    %0 = vector.load %arg1[%c0, %c0_0] : memref<8x16xf32, #tpu.memory_space<vmem>>, vector<8x16xf32>
    %1 = arith.truncf %0 : vector<8x16xf32> to vector<8x16xbf16>
    %c0_1 = arith.constant 0 : index
    %c0_2 = arith.constant 0 : index
    %2 = vector.load %arg2[%c0_1, %c0_2] : memref<16x128xbf16, #tpu.memory_space<vmem>>, vector<16x128xbf16>
    %cst = arith.constant dense<0.000000e+00> : vector<8x128xf32>
    %3 = tpu.matmul %1, %2, %cst {dimension_numbers = #tpu.dot_dimension_numbers<[1], [0], [0], [1], [0, 0, 1, 1], [], []>} : vector<8x16xbf16>, vector<16x128xbf16>, vector<8x128xf32> -> vector<8x128xf32>
    %c0_3 = arith.constant 0 : index
    %c0_4 = arith.constant 0 : index
    %4 = vector.load %arg6[%c0_3, %c0_4] : memref<4x128xf32, #tpu.memory_space<vmem>>, vector<1x128xf32>
    %5 = vector.broadcast %4 : vector<1x128xf32> to vector<8x128xf32>
    %6 = arith.addf %3, %5 : vector<8x128xf32>
    %cst_5 = arith.constant 0.000000e+00 : f32
    %7 = vector.broadcast %cst_5 : f32 to vector<8x128xf32>
    %8 = arith.maximumf %6, %7 : vector<8x128xf32>
    %9 = arith.truncf %8 : vector<8x128xf32> to vector<8x128xbf16>
    %c0_6 = arith.constant 0 : index
    %c0_7 = arith.constant 0 : index
    %10 = vector.load %arg3[%c0_6, %c0_7] : memref<128x128xbf16, #tpu.memory_space<vmem>>, vector<128x128xbf16>
    %cst_8 = arith.constant dense<0.000000e+00> : vector<8x128xf32>
    %11 = tpu.matmul %9, %10, %cst_8 {dimension_numbers = #tpu.dot_dimension_numbers<[1], [0], [0], [1], [0, 0, 1, 1], [], []>} : vector<8x128xbf16>, vector<128x128xbf16>, vector<8x128xf32> -> vector<8x128xf32>
    %c1 = arith.constant 1 : index
    %c0_9 = arith.constant 0 : index
    %12 = vector.load %arg6[%c1, %c0_9] : memref<4x128xf32, #tpu.memory_space<vmem>>, vector<1x128xf32>
    %13 = vector.broadcast %12 : vector<1x128xf32> to vector<8x128xf32>
    %14 = arith.addf %11, %13 : vector<8x128xf32>
    %cst_10 = arith.constant 0.000000e+00 : f32
    %15 = vector.broadcast %cst_10 : f32 to vector<8x128xf32>
    %16 = arith.maximumf %14, %15 : vector<8x128xf32>
    %17 = arith.truncf %16 : vector<8x128xf32> to vector<8x128xbf16>
    %c0_11 = arith.constant 0 : index
    %c0_12 = arith.constant 0 : index
    %18 = vector.load %arg4[%c0_11, %c0_12] : memref<128x128xbf16, #tpu.memory_space<vmem>>, vector<128x128xbf16>
    %cst_13 = arith.constant dense<0.000000e+00> : vector<8x128xf32>
    %19 = tpu.matmul %17, %18, %cst_13 {dimension_numbers = #tpu.dot_dimension_numbers<[1], [0], [0], [1], [0, 0, 1, 1], [], []>} : vector<8x128xbf16>, vector<128x128xbf16>, vector<8x128xf32> -> vector<8x128xf32>
    %c2 = arith.constant 2 : index
    %c0_14 = arith.constant 0 : index
    %20 = vector.load %arg6[%c2, %c0_14] : memref<4x128xf32, #tpu.memory_space<vmem>>, vector<1x128xf32>
    %21 = vector.broadcast %20 : vector<1x128xf32> to vector<8x128xf32>
    %22 = arith.addf %19, %21 : vector<8x128xf32>
    %cst_15 = arith.constant 0.000000e+00 : f32
    %23 = vector.broadcast %cst_15 : f32 to vector<8x128xf32>
    %24 = arith.maximumf %22, %23 : vector<8x128xf32>
    %25 = arith.truncf %24 : vector<8x128xf32> to vector<8x128xbf16>
    %c0_16 = arith.constant 0 : index
    %c0_17 = arith.constant 0 : index
    %26 = vector.load %arg5[%c0_16, %c0_17] : memref<128x8xbf16, #tpu.memory_space<vmem>>, vector<128x8xbf16>
    %cst_18 = arith.constant dense<0.000000e+00> : vector<8x8xf32>
    %27 = tpu.matmul %25, %26, %cst_18 {dimension_numbers = #tpu.dot_dimension_numbers<[1], [0], [0], [1], [0, 0, 1, 1], [], []>} : vector<8x128xbf16>, vector<128x8xbf16>, vector<8x8xf32> -> vector<8x8xf32>
    %c3 = arith.constant 3 : index
    %c0_19 = arith.constant 0 : index
    %28 = vector.load %arg6[%c3, %c0_19] : memref<4x128xf32, #tpu.memory_space<vmem>>, vector<1x8xf32>
    %29 = vector.broadcast %28 : vector<1x8xf32> to vector<8x8xf32>
    %30 = arith.addf %27, %29 : vector<8x8xf32>
    %c0_20 = arith.constant 0 : index
    %c0_21 = arith.constant 0 : index
    %31 = vector.load %arg7[%c0_20, %c0_21] : memref<8x8xf32, #tpu.memory_space<vmem>>, vector<8x8xf32>
    tpu.vector_store %arg7[%c0_20, %c0_21], %30 {strides = array<i32>} : memref<8x8xf32, #tpu.memory_space<vmem>>, vector<8x8xf32>,
    return
  }
  func.func @transform_0(%arg0: i32) -> (i32, i32) {
    %c0_i32 = arith.constant 0 : i32
    %c0_i32_0 = arith.constant 0 : i32
    return %arg0, %c0_i32 : i32, i32
  }
  func.func @transform_1(%arg0: i32) -> (i32, i32) {
    %c0_i32 = arith.constant 0 : i32
    %c0_i32_0 = arith.constant 0 : i32
    %c0_i32_1 = arith.constant 0 : i32
    return %c0_i32, %c0_i32_0 : i32, i32
  }
  func.func @transform_2(%arg0: i32) -> (i32, i32) {
    %c0_i32 = arith.constant 0 : i32
    %c0_i32_0 = arith.constant 0 : i32
    %c0_i32_1 = arith.constant 0 : i32
    return %c0_i32, %c0_i32_0 : i32, i32
  }
  func.func @transform_3(%arg0: i32) -> (i32, i32) {
    %c0_i32 = arith.constant 0 : i32
    %c0_i32_0 = arith.constant 0 : i32
    %c0_i32_1 = arith.constant 0 : i32
    return %c0_i32, %c0_i32_0 : i32, i32
  }
  func.func @transform_4(%arg0: i32) -> (i32, i32) {
    %c0_i32 = arith.constant 0 : i32
    %c0_i32_0 = arith.constant 0 : i32
    %c0_i32_1 = arith.constant 0 : i32
    return %c0_i32, %c0_i32_0 : i32, i32
  }
  func.func @transform_5(%arg0: i32) -> (i32, i32) {
    %c0_i32 = arith.constant 0 : i32
    %c0_i32_0 = arith.constant 0 : i32
    %c0_i32_1 = arith.constant 0 : i32
    return %c0_i32, %c0_i32_0 : i32, i32
  }
  func.func @transform_6(%arg0: i32) -> (i32, i32) {
    %c0_i32 = arith.constant 0 : i32
    %c0_i32_0 = arith.constant 0 : i32
    return %arg0, %c0_i32 : i32, i32
  }
}

</mosaic_0001>

<llo_original>
// kernel: tpu_custom_call.1
$region0: #{tpu_custom_call.1}
  #allocation0 [shape = 'u32[]', space=smem, size = 0x4, offset = 0x4, fixed_abs, tag = 'smem constant byte address 0x4 - core index']
  #allocation1 [shape = 'u32[144,128]{1,0:T(1,128)}', space=vmem, size = 0x12000, scoped, tag = 'internal scratch']
  %s0 = inlined_call_operand.vmem [shape: f32[8,16], index: 0, kind: input, shape index: {}]
  %s1 = inlined_call_operand.hbm [shape: bf16[16,128], index: 1, kind: input, shape index: {}]
  %s2 = inlined_call_operand.vmem [shape: bf16[128,128], index: 2, kind: input, shape index: {}]
  %s3 = inlined_call_operand.hbm [shape: bf16[128,128], index: 3, kind: input, shape index: {}]
  %s4 = inlined_call_operand.vmem [shape: bf16[128,8], index: 4, kind: input, shape index: {}]
  %s5 = inlined_call_operand.vmem [shape: f32[4,128], index: 5, kind: input, shape index: {}]
  %s6 = inlined_call_operand.hbm [shape: f32[8,8], index: 6, kind: output, shape index: {}]
  %s7 = sld [smem:[#allocation0]]
  $region42: #{tpu_custom_call.1} parent=0
    _
  %s9 = ssub.s32 1, %s7
  %s10 = scalar_select 0, %s9, %s7
  $region1: #{tpu_custom_call.1} parent=0
    #allocation2 [shape = 'u8[4096]{0}', space=vmem, size = 0x1000, scoped, tag = 'input window, operand 1, single buffered']
    #allocation3 [shape = 's32[1]{0}', space=sflag, size = 0x4, scoped, tag = 'scoped memory for tpu_custom_call.1']
    #allocation4 [shape = 's32[1]{0}', space=sflag, size = 0x4, scoped, tag = 'scoped memory for tpu_custom_call.1']
    #allocation5 [shape = 'u8[32768]{0}', space=vmem, size = 0x8000, scoped, tag = 'input window, operand 3, single buffered']
    #allocation6 [shape = 's32[1]{0}', space=sflag, size = 0x4, scoped, tag = 'scoped memory for tpu_custom_call.1']
    #allocation7 [shape = 'u8[4096]{0}', space=vmem, size = 0x1000, scoped, tag = 'output window, operand 0, single buffered']
    %11 = vsyncpa [#allocation3], 0
    %12 = vsyncpa [#allocation6], 0
    %13 = vsyncpa [#allocation4], 0
    // Predicated region
    $region2: #{tpu_custom_call.1} parent=1 // pred_check
      _
    $region3: #{tpu_custom_call.1} parent=1 // pred_check_branch
      %15 = sbr.rel (0) target = $region5
    $region4: #{tpu_custom_call.1} parent=1 // pred_region
      _
    $region5: #{tpu_custom_call.1} parent=1 // pred_fallthru
      _
    // Predicated region
    $region6: #{tpu_custom_call.1} parent=1 // pred_check
      _
    $region7: #{tpu_custom_call.1} parent=1 // pred_check_branch
      %17 = sbr.rel (0) target = $region9
    $region8: #{tpu_custom_call.1} parent=1 // pred_region
      %s19 = ssub.s32 128, 128
      %20 = vsyncadd [#allocation3], %s19
      %s21 = sshll.u32 [#allocation2], 4
      %s22 = int_to_ptr.vmem [resolvable:$true] %s21
      %27 = dma.hbm_to_vmem [thread:$0]  %s1, 128, %s22, [#allocation3], 64, 64, 4
    $region9: #{tpu_custom_call.1} parent=1 // pred_fallthru
      _
    // Predicated region
    $region10: #{tpu_custom_call.1} parent=1 // pred_check
      _
    $region11: #{tpu_custom_call.1} parent=1 // pred_check_branch
      %29 = sbr.rel (0) target = $region13
    $region12: #{tpu_custom_call.1} parent=1 // pred_region
      _
    $region13: #{tpu_custom_call.1} parent=1 // pred_fallthru
      _
    // Predicated region
    $region14: #{tpu_custom_call.1} parent=1 // pred_check
      _
    $region15: #{tpu_custom_call.1} parent=1 // pred_check_branch
      %31 = sbr.rel (0) target = $region17
    $region16: #{tpu_custom_call.1} parent=1 // pred_region
      %s33 = ssub.s32 1024, 1024
      %34 = vsyncadd [#allocation6], %s33
      %s35 = sshll.u32 [#allocation5], 4
      %s36 = int_to_ptr.vmem [resolvable:$true] %s35
      %41 = dma.hbm_to_vmem [thread:$0]  %s3, 1024, %s36, [#allocation6], 64, 64, 4
    $region17: #{tpu_custom_call.1} parent=1 // pred_fallthru
      _
    // Predicated region
    $region18: #{tpu_custom_call.1} parent=1 // pred_check
      _
    $region19: #{tpu_custom_call.1} parent=1 // pred_check_branch
      %43 = sbr.rel (0) target = $region21
    $region20: #{tpu_custom_call.1} parent=1 // pred_region
      _
    $region21: #{tpu_custom_call.1} parent=1 // pred_fallthru
      _
    // Predicated region
    $region22: #{tpu_custom_call.1} parent=1 // pred_check
      _
    $region23: #{tpu_custom_call.1} parent=1 // pred_check_branch
      %45 = sbr.rel (0) target = $region25
    $region24: #{tpu_custom_call.1} parent=1 // pred_region
      _
    $region25: #{tpu_custom_call.1} parent=1 // pred_fallthru
      _
    // Predicated region
    $region26: #{tpu_custom_call.1} parent=1 // pred_check
      _
    $region27: #{tpu_custom_call.1} parent=1 // pred_check_branch
      %47 = sbr.rel (0) target = $region29
    $region28: #{tpu_custom_call.1} parent=1 // pred_region
      %48 = dma.done [#allocation3], 128
    $region29: #{tpu_custom_call.1} parent=1 // pred_fallthru
      _
    // Predicated region
    $region30: #{tpu_custom_call.1} parent=1 // pred_check
      _
    $region31: #{tpu_custom_call.1} parent=1 // pred_check_branch
      %50 = sbr.rel (0) target = $region33
    $region32: #{tpu_custom_call.1} parent=1 // pred_region
      %51 = dma.done [#allocation6], 1024
    $region33: #{tpu_custom_call.1} parent=1 // pred_fallthru
      _
    %v53 = vld [vmem:[%s0] sm:$0xff]
    %v54 = vpack.c.bf16 %v53, %v53
    %v55 = vld [vmem:[#allocation2] sm:$0xf]
    %v56 = vld [vmem:[#allocation2 + $0x4] sm:$0xf]
    %v57 = vld [vmem:[%s5] sm:$0x1]
    %v58 = vlaneseq
    %v59 = vshrl.u32 %v58, 7
    %v60 = vsub.s32 0, %v59
    %v61 = vrot.slane %v57, %v60
    %v64 = vunpack.c.l.b16 %v55
    %v65 = vunpack.c.l.b16 %v56
    %v66 = vpack.c.b16 %v65, %v64
    %vm68 = vcmask 130048
    %v70 = vsel %vm68, %v54, 0
    %72 = vmatprep.subr.bf16.mxu0 0
    %73 = vmatpush1.bf16.msra.mxu0 %v66
    %74 = vmatprep.subr.bf16.mxu0 0
    %75 = vmatpush1.bf16.msra.mxu0 0
    %76 = vmatprep.subr.bf16.mxu0 0
    %77 = vmatpush1.bf16.msra.mxu0 0
    %78 = vmatprep.subr.bf16.mxu0 0
    %79 = vmatpush1.bf16.msra.mxu0 0
    %80 = vmatprep.subr.bf16.mxu0 0
    %81 = vmatpush1.bf16.msra.mxu0 0
    %82 = vmatprep.subr.bf16.mxu0 0
    %83 = vmatpush1.bf16.msra.mxu0 0
    %84 = vmatprep.subr.bf16.mxu0 0
    %85 = vmatpush1.bf16.msra.mxu0 0
    %86 = vmatprep.subr.bf16.mxu0 0
    %87 = vmatpush1.bf16.msra.mxu0 0
    %88 = vmatprep.subr.bf16.mxu0 0
    %89 = vmatpush1.bf16.msra.mxu0 0
    %90 = vmatprep.subr.bf16.mxu0 0
    %91 = vmatpush1.bf16.msra.mxu0 0
    %92 = vmatprep.subr.bf16.mxu0 0
    %93 = vmatpush1.bf16.msra.mxu0 0
    %94 = vmatprep.subr.bf16.mxu0 0
    %95 = vmatpush1.bf16.msra.mxu0 0
    %96 = vmatprep.subr.bf16.mxu0 0
    %97 = vmatpush1.bf16.msra.mxu0 0
    %98 = vmatprep.subr.bf16.mxu0 0
    %99 = vmatpush1.bf16.msra.mxu0 0
    %100 = vmatprep.subr.bf16.mxu0 0
    %101 = vmatpush1.bf16.msra.mxu0 0
    %102 = vmatprep.subr.bf16.mxu0 0
    %103 = vmatpush1.bf16.msra.mxu0 0
    %104 = vmatprep.mubr.bf16.mxu0 0
    %105 = vmatmul.mubr.bf16.gmra.mrb[0].mxu0 %v70
    %v106 = vpop.f32.mrb[0].mxu0
    %v107 = vadd.f32 %v61, %v106
    %v108 = vpop.f32.mrb[0].mxu0
    %v109 = vpop.f32.mrb[0].mxu0
    %v110 = vpop.f32.mrb[0].mxu0
    %111 = vdwg.mxu0
    %v112 = vmax.f32 %v107, 0.0
    %v113 = vpack.c.bf16 %v112, %v112
    %v114 = vld [vmem:[%s2] sm:$0xf]
    %v115 = vld [vmem:[%s2 + $0x4] sm:$0xf]
    %v116 = vld [vmem:[%s2 + $0x8] sm:$0xf]
    %v117 = vld [vmem:[%s2 + $0xc] sm:$0xf]
    %v118 = vld [vmem:[%s2 + $0x10] sm:$0xf]
    %v119 = vld [vmem:[%s2 + $0x14] sm:$0xf]
    %v120 = vld [vmem:[%s2 + $0x18] sm:$0xf]
    %v121 = vld [vmem:[%s2 + $0x1c] sm:$0xf]
    %v122 = vld [vmem:[%s2 + $0x20] sm:$0xf]
    %v123 = vld [vmem:[%s2 + $0x24] sm:$0xf]
    %v124 = vld [vmem:[%s2 + $0x28] sm:$0xf]
    %v125 = vld [vmem:[%s2 + $0x2c] sm:$0xf]
    %v126 = vld [vmem:[%s2 + $0x30] sm:$0xf]
    %v127 = vld [vmem:[%s2 + $0x34] sm:$0xf]
    %v128 = vld [vmem:[%s2 + $0x38] sm:$0xf]
    %v129 = vld [vmem:[%s2 + $0x3c] sm:$0xf]
    %v130 = vld [vmem:[%s5 + $0x1] sm:$0x1]
    %v131 = vlaneseq
    %v132 = vshrl.u32 %v131, 7
    %v133 = vsub.s32 0, %v132
    %v134 = vrot.slane %v130, %v133
    %v151 = vunpack.c.l.b16 %v114
    %v152 = vunpack.c.l.b16 %v115
    %v153 = vunpack.c.l.b16 %v116
    %v154 = vunpack.c.l.b16 %v117
    %v155 = vunpack.c.l.b16 %v118
    %v156 = vunpack.c.l.b16 %v119
    %v157 = vunpack.c.l.b16 %v120
    %v158 = vunpack.c.l.b16 %v121
    %v159 = vunpack.c.l.b16 %v122
    %v160 = vunpack.c.l.b16 %v123
    %v161 = vunpack.c.l.b16 %v124
    %v162 = vunpack.c.l.b16 %v125
    %v163 = vunpack.c.l.b16 %v126
    %v164 = vunpack.c.l.b16 %v127
    %v165 = vunpack.c.l.b16 %v128
    %v166 = vunpack.c.l.b16 %v129
    %v167 = vpack.c.b16 %v152, %v151
    %v168 = vpack.c.b16 %v154, %v153
    %v169 = vpack.c.b16 %v156, %v155
    %v170 = vpack.c.b16 %v158, %v157
    %v171 = vpack.c.b16 %v160, %v159
    %v172 = vpack.c.b16 %v162, %v161
    %v173 = vpack.c.b16 %v164, %v163
    %v174 = vpack.c.b16 %v166, %v165
    %183 = vmatprep.subr.bf16.mxu0 0
    %184 = vmatpush1.bf16.msra.mxu0 %v167
    %185 = vmatprep.subr.bf16.mxu0 0
    %186 = vmatpush1.bf16.msra.mxu0 %v168
    %187 = vmatprep.subr.bf16.mxu0 0
    %188 = vmatpush1.bf16.msra.mxu0 %v169
    %189 = vmatprep.subr.bf16.mxu0 0
    %190 = vmatpush1.bf16.msra.mxu0 %v170
    %191 = vmatprep.subr.bf16.mxu0 0
    %192 = vmatpush1.bf16.msra.mxu0 %v171
    %193 = vmatprep.subr.bf16.mxu0 0
    %194 = vmatpush1.bf16.msra.mxu0 %v172
    %195 = vmatprep.subr.bf16.mxu0 0
    %196 = vmatpush1.bf16.msra.mxu0 %v173
    %197 = vmatprep.subr.bf16.mxu0 0
    %198 = vmatpush1.bf16.msra.mxu0 %v174
    %199 = vmatprep.subr.bf16.mxu0 0
    %200 = vmatpush1.bf16.msra.mxu0 0
    %201 = vmatprep.subr.bf16.mxu0 0
    %202 = vmatpush1.bf16.msra.mxu0 0
    %203 = vmatprep.subr.bf16.mxu0 0
    %204 = vmatpush1.bf16.msra.mxu0 0
    %205 = vmatprep.subr.bf16.mxu0 0
    %206 = vmatpush1.bf16.msra.mxu0 0
    %207 = vmatprep.subr.bf16.mxu0 0
    %208 = vmatpush1.bf16.msra.mxu0 0
    %209 = vmatprep.subr.bf16.mxu0 0
    %210 = vmatpush1.bf16.msra.mxu0 0
    %211 = vmatprep.subr.bf16.mxu0 0
    %212 = vmatpush1.bf16.msra.mxu0 0
    %213 = vmatprep.subr.bf16.mxu0 0
    %214 = vmatpush1.bf16.msra.mxu0 0
    %215 = vmatprep.mubr.bf16.mxu0 0
    %216 = vmatmul.mubr.bf16.gmra.mrb[0].mxu0 %v113
    %v217 = vpop.f32.mrb[0].mxu0
    %v218 = vadd.f32 %v134, %v217
    %v219 = vpop.f32.mrb[0].mxu0
    %v220 = vpop.f32.mrb[0].mxu0
    %v221 = vpop.f32.mrb[0].mxu0
    %222 = vdwg.mxu0
    %v223 = vmax.f32 %v218, 0.0
    %v224 = vpack.c.bf16 %v223, %v223
    %v225 = vld [vmem:[#allocation5] sm:$0xf]
    %v226 = vld [vmem:[#allocation5 + $0x4] sm:$0xf]
    %v227 = vld [vmem:[#allocation5 + $0x8] sm:$0xf]
    %v228 = vld [vmem:[#allocation5 + $0xc] sm:$0xf]
    %v229 = vld [vmem:[#allocation5 + $0x10] sm:$0xf]
    %v230 = vld [vmem:[#allocation5 + $0x14] sm:$0xf]
    %v231 = vld [vmem:[#allocation5 + $0x18] sm:$0xf]
    %v232 = vld [vmem:[#allocation5 + $0x1c] sm:$0xf]
    %v233 = vld [vmem:[#allocation5 + $0x20] sm:$0xf]
    %v234 = vld [vmem:[#allocation5 + $0x24] sm:$0xf]
    %v235 = vld [vmem:[#allocation5 + $0x28] sm:$0xf]
    %v236 = vld [vmem:[#allocation5 + $0x2c] sm:$0xf]
    %v237 = vld [vmem:[#allocation5 + $0x30] sm:$0xf]
    %v238 = vld [vmem:[#allocation5 + $0x34] sm:$0xf]
    %v239 = vld [vmem:[#allocation5 + $0x38] sm:$0xf]
    %v240 = vld [vmem:[#allocation5 + $0x3c] sm:$0xf]
    %v241 = vld [vmem:[%s5 + $0x2] sm:$0x1]
    %v242 = vlaneseq
    %v243 = vshrl.u32 %v242, 7
    %v244 = vsub.s32 0, %v243
    %v245 = vrot.slane %v241, %v244
    %v262 = vunpack.c.l.b16 %v225
    %v263 = vunpack.c.l.b16 %v226
    %v264 = vunpack.c.l.b16 %v227
    %v265 = vunpack.c.l.b16 %v228
    %v266 = vunpack.c.l.b16 %v229
    %v267 = vunpack.c.l.b16 %v230
    %v268 = vunpack.c.l.b16 %v231
    %v269 = vunpack.c.l.b16 %v232
    %v270 = vunpack.c.l.b16 %v233
    %v271 = vunpack.c.l.b16 %v234
    %v272 = vunpack.c.l.b16 %v235
    %v273 = vunpack.c.l.b16 %v236
    %v274 = vunpack.c.l.b16 %v237
    %v275 = vunpack.c.l.b16 %v238
    %v276 = vunpack.c.l.b16 %v239
    %v277 = vunpack.c.l.b16 %v240
    %v278 = vpack.c.b16 %v263, %v262
    %v279 = vpack.c.b16 %v265, %v264
    %v280 = vpack.c.b16 %v267, %v266
    %v281 = vpack.c.b16 %v269, %v268
    %v282 = vpack.c.b16 %v271, %v270
    %v283 = vpack.c.b16 %v273, %v272
    %v284 = vpack.c.b16 %v275, %v274
    %v285 = vpack.c.b16 %v277, %v276
    %294 = vmatprep.subr.bf16.mxu0 0
    %295 = vmatpush1.bf16.msra.mxu0 %v278
    %296 = vmatprep.subr.bf16.mxu0 0
    %297 = vmatpush1.bf16.msra.mxu0 %v279
    %298 = vmatprep.subr.bf16.mxu0 0
    %299 = vmatpush1.bf16.msra.mxu0 %v280
    %300 = vmatprep.subr.bf16.mxu0 0
    %301 = vmatpush1.bf16.msra.mxu0 %v281
    %302 = vmatprep.subr.bf16.mxu0 0
    %303 = vmatpush1.bf16.msra.mxu0 %v282
    %304 = vmatprep.subr.bf16.mxu0 0
    %305 = vmatpush1.bf16.msra.mxu0 %v283
    %306 = vmatprep.subr.bf16.mxu0 0
    %307 = vmatpush1.bf16.msra.mxu0 %v284
    %308 = vmatprep.subr.bf16.mxu0 0
    %309 = vmatpush1.bf16.msra.mxu0 %v285
    %310 = vmatprep.subr.bf16.mxu0 0
    %311 = vmatpush1.bf16.msra.mxu0 0
    %312 = vmatprep.subr.bf16.mxu0 0
    %313 = vmatpush1.bf16.msra.mxu0 0
    %314 = vmatprep.subr.bf16.mxu0 0
    %315 = vmatpush1.bf16.msra.mxu0 0
    %316 = vmatprep.subr.bf16.mxu0 0
    %317 = vmatpush1.bf16.msra.mxu0 0
    %318 = vmatprep.subr.bf16.mxu0 0
    %319 = vmatpush1.bf16.msra.mxu0 0
    %320 = vmatprep.subr.bf16.mxu0 0
    %321 = vmatpush1.bf16.msra.mxu0 0
    %322 = vmatprep.subr.bf16.mxu0 0
    %323 = vmatpush1.bf16.msra.mxu0 0
    %324 = vmatprep.subr.bf16.mxu0 0
    %325 = vmatpush1.bf16.msra.mxu0 0
    %326 = vmatprep.mubr.bf16.mxu0 0
    %327 = vmatmul.mubr.bf16.gmra.mrb[0].mxu0 %v224
    %v328 = vpop.f32.mrb[0].mxu0
    %v329 = vadd.f32 %v245, %v328
    %v330 = vpop.f32.mrb[0].mxu0
    %v331 = vpop.f32.mrb[0].mxu0
    %v332 = vpop.f32.mrb[0].mxu0
    %333 = vdwg.mxu0
    %v334 = vmax.f32 %v329, 0.0
    %v335 = vpack.c.bf16 %v334, %v334
    %v336 = vld [vmem:[%s4] sm:$0xf]
    %v337 = vld [vmem:[%s4 + $0x4] sm:$0xf]
    %v338 = vld [vmem:[%s4 + $0x8] sm:$0xf]
    %v339 = vld [vmem:[%s4 + $0xc] sm:$0xf]
    %v340 = vld [vmem:[%s4 + $0x10] sm:$0xf]
    %v341 = vld [vmem:[%s4 + $0x14] sm:$0xf]
    %v342 = vld [vmem:[%s4 + $0x18] sm:$0xf]
    %v343 = vld [vmem:[%s4 + $0x1c] sm:$0xf]
    %v344 = vld [vmem:[%s4 + $0x20] sm:$0xf]
    %v345 = vld [vmem:[%s4 + $0x24] sm:$0xf]
    %v346 = vld [vmem:[%s4 + $0x28] sm:$0xf]
    %v347 = vld [vmem:[%s4 + $0x2c] sm:$0xf]
    %v348 = vld [vmem:[%s4 + $0x30] sm:$0xf]
    %v349 = vld [vmem:[%s4 + $0x34] sm:$0xf]
    %v350 = vld [vmem:[%s4 + $0x38] sm:$0xf]
    %v351 = vld [vmem:[%s4 + $0x3c] sm:$0xf]
    %v352 = vld [vmem:[%s5 + $0x3] sm:$0x1]
    %v353 = vlaneseq
    %v354 = vshrl.u32 %v353, 7
    %v355 = vsub.s32 0, %v354
    %v356 = vrot.slane %v352, %v355
    %v373 = vunpack.c.l.b16 %v336
    %v374 = vunpack.c.l.b16 %v337
    %v375 = vunpack.c.l.b16 %v338
    %v376 = vunpack.c.l.b16 %v339
    %v377 = vunpack.c.l.b16 %v340
    %v378 = vunpack.c.l.b16 %v341
    %v379 = vunpack.c.l.b16 %v342
    %v380 = vunpack.c.l.b16 %v343
    %v381 = vunpack.c.l.b16 %v344
    %v382 = vunpack.c.l.b16 %v345
    %v383 = vunpack.c.l.b16 %v346
    %v384 = vunpack.c.l.b16 %v347
    %v385 = vunpack.c.l.b16 %v348
    %v386 = vunpack.c.l.b16 %v349
    %v387 = vunpack.c.l.b16 %v350
    %v388 = vunpack.c.l.b16 %v351
    %v389 = vpack.c.b16 %v374, %v373
    %v390 = vpack.c.b16 %v376, %v375
    %v391 = vpack.c.b16 %v378, %v377
    %v392 = vpack.c.b16 %v380, %v379
    %v393 = vpack.c.b16 %v382, %v381
    %v394 = vpack.c.b16 %v384, %v383
    %v395 = vpack.c.b16 %v386, %v385
    %v396 = vpack.c.b16 %v388, %v387
    %405 = vmatprep.subr.bf16.mxu0 0
    %406 = vmatpush1.bf16.msra.mxu0 %v389
    %407 = vmatprep.subr.bf16.mxu0 0
    %408 = vmatpush1.bf16.msra.mxu0 %v390
    %409 = vmatprep.subr.bf16.mxu0 0
    %410 = vmatpush1.bf16.msra.mxu0 %v391
    %411 = vmatprep.subr.bf16.mxu0 0
    %412 = vmatpush1.bf16.msra.mxu0 %v392
    %413 = vmatprep.subr.bf16.mxu0 0
    %414 = vmatpush1.bf16.msra.mxu0 %v393
    %415 = vmatprep.subr.bf16.mxu0 0
    %416 = vmatpush1.bf16.msra.mxu0 %v394
    %417 = vmatprep.subr.bf16.mxu0 0
    %418 = vmatpush1.bf16.msra.mxu0 %v395
    %419 = vmatprep.subr.bf16.mxu0 0
    %420 = vmatpush1.bf16.msra.mxu0 %v396
    %421 = vmatprep.subr.bf16.mxu0 0
    %422 = vmatpush1.bf16.msra.mxu0 0
    %423 = vmatprep.subr.bf16.mxu0 0
    %424 = vmatpush1.bf16.msra.mxu0 0
    %425 = vmatprep.subr.bf16.mxu0 0
    %426 = vmatpush1.bf16.msra.mxu0 0
    %427 = vmatprep.subr.bf16.mxu0 0
    %428 = vmatpush1.bf16.msra.mxu0 0
    %429 = vmatprep.subr.bf16.mxu0 0
    %430 = vmatpush1.bf16.msra.mxu0 0
    %431 = vmatprep.subr.bf16.mxu0 0
    %432 = vmatpush1.bf16.msra.mxu0 0
    %433 = vmatprep.subr.bf16.mxu0 0
    %434 = vmatpush1.bf16.msra.mxu0 0
    %435 = vmatprep.subr.bf16.mxu0 0
    %436 = vmatpush1.bf16.msra.mxu0 0
    %437 = vmatprep.mubr.bf16.mxu0 0
    %438 = vmatmul.mubr.bf16.gmra.mrb[0].mxu0 %v335
    %v439 = vpop.f32.mrb[0].mxu0
    %v440 = vadd.f32 %v356, %v439
    %v441 = vpop.f32.mrb[0].mxu0
    %v442 = vpop.f32.mrb[0].mxu0
    %v443 = vpop.f32.mrb[0].mxu0
    %444 = vdwg.mxu0
    %vm445 = vcmask 64512
    %446 = vst.msk [vmem:[#allocation7] sm:$0xff] %vm445, %v440
    // Predicated region
    $region34: #{tpu_custom_call.1} parent=1 // pred_check
      _
    $region35: #{tpu_custom_call.1} parent=1 // pred_check_branch
      %448 = sbr.rel (0) target = $region37
    $region36: #{tpu_custom_call.1} parent=1 // pred_region
      %s450 = ssub.s32 128, 128
      %451 = vsyncadd [#allocation4], %s450
      %s453 = sshll.u32 [#allocation7], 4
      %s454 = int_to_ptr.vmem [resolvable:$true] %s453
      %456 = dma.vmem_to_hbm [thread:$0]  %s454, 128, %s6, [#allocation4]
    $region37: #{tpu_custom_call.1} parent=1 // pred_fallthru
      _
    // Predicated region
    $region38: #{tpu_custom_call.1} parent=1 // pred_check
      _
    $region39: #{tpu_custom_call.1} parent=1 // pred_check_branch
      %458 = sbr.rel (0) target = $region41
    $region40: #{tpu_custom_call.1} parent=1 // pred_region
      %459 = dma.done [#allocation4], 128
    $region41: #{tpu_custom_call.1} parent=1 // pred_fallthru
      _
    %460 = vsyncpa [#allocation3], 1
    %461 = vsyncpa [#allocation6], 1
    %462 = vsyncpa [#allocation4], 1

</llo_original>
